<compile_context>
chip_gen: v7x
topology: tpu7x:2x2x1
jax: 0.10.0
libtpu: 0.0.40
codegen_flags: <defaults>
</compile_context>

<pallas_src>
import functools

import jax
import jax.numpy as jnp
from jax.experimental import pallas as pl
from jax.experimental.pallas import tpu as pltpu

LANES = 128
SUBLANES = 8                      # f32 accumulator sublane count
CHUNK_ROWS = 512                  # rows folded per inner-loop step
TARGET_BLOCK_BYTES = 4 << 20      # ~4 MiB per input block -> ~8 MiB HBM / grid step
VMEM_LIMIT_BYTES = 40 << 20       # 2 inputs x 2 pipeline bufs x 4 MiB + headroom
NUM_CORES = 2                     # leading "parallel" axis; harmless on 1-TC chips


def _round_up(x, m):
    return ((x + m - 1) // m) * m


def _rmse_kernel(pred_ref, gt_ref, out_ref, acc_ref, *,
                 rows, tile_rows, chunk_rows, blocks_per_core, needs_mask):
    c = pl.program_id(0)               # core (parallel) axis
    i = pl.program_id(1)               # reduction (arbitrary) axis
    blk = c * blocks_per_core + i      # global row-block index (may overhang; masked)

    @pl.when(i == 0)
    def _():
        acc_ref[...] = jnp.zeros_like(acc_ref)

    n_chunks = tile_rows // chunk_rows

    def fold(masked):
        def chunk_body(k, carry):
            start = k * chunk_rows
            if not isinstance(start, int):
                start = pl.multiple_of(start, chunk_rows)
            # Cast per-chunk inside the kernel (HBM traffic stays at native width).
            d = (pred_ref[pl.ds(start, chunk_rows), :].astype(jnp.float32)
                 - gt_ref[pl.ds(start, chunk_rows), :].astype(jnp.float32))
            sq = d * d
            if masked:
                # Rows past the real array extent (partial last block / overhanging
                # core-1 blocks) contribute exactly zero; where() selects, so any
                # garbage/NaN in the padded region cannot leak.
                local_row = jax.lax.broadcasted_iota(jnp.int32, (chunk_rows, 1), 0)
                global_row = blk * tile_rows + start + local_row
                sq = jnp.where(global_row < rows, sq, 0.0)
            # Pure VPU adds: fold the chunk into one (8,128) vreg accumulator.
            acc_ref[...] += sq.reshape(chunk_rows // SUBLANES, SUBLANES, LANES).sum(axis=0)
            return carry

        if n_chunks == 1:
            chunk_body(0, 0)
        else:
            jax.lax.fori_loop(0, n_chunks, chunk_body, 0, unroll=True)

    if needs_mask:
        in_bounds = (blk + 1) * tile_rows <= rows

        @pl.when(in_bounds)
        def _():
            fold(False)            # fast path: no iota / compare / select

        @pl.when(jnp.logical_not(in_bounds))
        def _():
            fold(True)             # only the overhanging block(s) pay for the mask
    else:
        fold(False)

    @pl.when(i == pl.num_programs(1) - 1)
    def _():
        # Emit the per-core partial-sum slab; cross-lane reduce + sqrt are done
        # once in the wrapper.
        out_ref[0, :, :] = acc_ref[...]


def rmse_loss(pred, gt):
    assert pred.shape == gt.shape, "pred and gt must have identical shapes"
    n = pred.size
    assert n > 0

    p = pred.reshape(-1)
    g = gt.reshape(-1)

    full_rows = n // LANES
    tail = n - full_rows * LANES

    # Ragged <128-element tail: tiny jnp sum-of-squares, no full-array pad copy.
    tail_sum = jnp.float32(0.0)
    if tail:
        tail_sum = jnp.sum(
            (p[full_rows * LANES:].astype(jnp.float32)
             - g[full_rows * LANES:].astype(jnp.float32)) ** 2)

    if full_rows == 0:
        total = tail_sum
    else:
        itemsize = jnp.dtype(pred.dtype).itemsize
        packing = max(SUBLANES, 32 // itemsize)          # 8 f32 / 16 bf16 / 32 int8
        max_tile_rows = TARGET_BLOCK_BYTES // (LANES * itemsize)

        if tail:
            # TODO(synk): fold the whole-row prefix slice into the kernel (1-D blocks
            # + in-kernel element mask) to avoid this prefix copy on ragged sizes.
            p2 = p[: full_rows * LANES]
            g2 = g[: full_rows * LANES]
        else:
            p2, g2 = p, g
        p2 = p2.reshape(full_rows, LANES)
        g2 = g2.reshape(full_rows, LANES)

        tile_rows = min(max_tile_rows, _round_up(full_rows, packing))
        if tile_rows <= CHUNK_ROWS or tile_rows % CHUNK_ROWS != 0:
            chunk_rows = tile_rows
        else:
            chunk_rows = CHUNK_ROWS

        total_blocks = pl.cdiv(full_rows, tile_rows)
        blocks_per_core = pl.cdiv(total_blocks, NUM_CORES)
        needs_mask = (full_rows % tile_rows != 0) or (total_blocks % NUM_CORES != 0)
        grid = (NUM_CORES, blocks_per_core)

        def in_index_map(c, i):
            # Clamp so overhanging blocks keep the DMA in-bounds; their
            # contribution is masked to zero inside the kernel.
            return (jnp.minimum(c * blocks_per_core + i, total_blocks - 1), 0)

        kernel = functools.partial(
            _rmse_kernel,
            rows=full_rows,
            tile_rows=tile_rows,
            chunk_rows=chunk_rows,
            blocks_per_core=blocks_per_core,
            needs_mask=needs_mask,
        )

        cost = pl.CostEstimate(
            flops=3 * n,                                  # sub + mul + add per element
            transcendentals=0,                            # sqrt happens in the wrapper
            bytes_accessed=2 * n * itemsize + NUM_CORES * SUBLANES * LANES * 4,
        )

        partials = pl.pallas_call(
            kernel,
            out_shape=jax.ShapeDtypeStruct((NUM_CORES, SUBLANES, LANES), jnp.float32),
            grid_spec=pltpu.PrefetchScalarGridSpec(
                num_scalar_prefetch=0,
                grid=grid,
                in_specs=[
                    pl.BlockSpec((tile_rows, LANES), in_index_map),
                    pl.BlockSpec((tile_rows, LANES), in_index_map),
                ],
                out_specs=pl.BlockSpec((1, SUBLANES, LANES), lambda c, i: (c, 0, 0)),
                scratch_shapes=[pltpu.VMEM((SUBLANES, LANES), jnp.float32)],
            ),
            compiler_params=pltpu.CompilerParams(
                dimension_semantics=("parallel", "arbitrary"),
                vmem_limit_bytes=VMEM_LIMIT_BYTES,
            ),
            cost_estimate=cost,
        )(p2, g2)

        total = jnp.sum(partials, dtype=jnp.float32) + tail_sum

    out_dtype = pred.dtype if jnp.issubdtype(pred.dtype, jnp.floating) else jnp.float32
    return jnp.sqrt(total / n).astype(out_dtype)


if __name__ == "__main__":
    key = jax.random.PRNGKey(0)
    k1, k2 = jax.random.split(key)
    shape = (2, 4, 16, 16)  # NCHW-like synthetic inputs
    pred = jax.random.normal(k1, shape, dtype=jnp.float32)
    gt = jax.random.normal(k2, shape, dtype=jnp.float32)

    loss = rmse_loss(pred, gt)
    jax.block_until_ready(loss)

    ref = jnp.sqrt(jnp.mean((pred - gt) ** 2))
    assert jnp.allclose(loss, ref, rtol=1e-5, atol=1e-6), (loss, ref)
    print("KERNEL_OK")
</pallas_src>

<mosaic_0001>
module attributes {stable_mosaic.version = 11 : i64} {
  func.func @_rmse_kernel(%arg0: i32, %arg1: i32, %arg2: memref<16x128xf32, #tpu.memory_space<vmem>>, %arg3: memref<16x128xf32, #tpu.memory_space<vmem>>, %arg4: memref<1x8x128xf32, #tpu.memory_space<vmem>>, %arg5: memref<8x128xf32, #tpu.memory_space<vmem>>) attributes {dimension_semantics = [#tpu.dimension_semantics<parallel>, #tpu.dimension_semantics<arbitrary>], iteration_bounds = array<i64: 2, 1>, scalar_prefetch = 0 : i64, scratch_operands = 1 : i64, tpu.core_type = #tpu.core_type<tc>, window_params = [{transform_indices = @transform_0, window_bounds = array<i64: 16, 128>}, {transform_indices = @transform_1, window_bounds = array<i64: 16, 128>}, {transform_indices = @transform_2, window_bounds = array<i64: 1, 8, 128>}]} {
    %c1_i32 = arith.constant 1 : i32
    %0 = arith.muli %arg0, %c1_i32 : i32
    %1 = arith.addi %0, %arg1 : i32
    %c0_i32 = arith.constant 0 : i32
    %2 = arith.cmpi eq, %arg1, %c0_i32 : i32
    %3 = arith.extui %2 : i1 to i32
    %c0_i32_0 = arith.constant 0 : i32
    %4 = arith.cmpi ne, %3, %c0_i32_0 : i32
    scf.if %4 {
      %cst = arith.constant 0.000000e+00 : f32
      %16 = vector.broadcast %cst : f32 to vector<8x128xf32>
      %c0 = arith.constant 0 : index
      %c0_7 = arith.constant 0 : index
      %17 = vector.load %arg5[%c0, %c0_7] : memref<8x128xf32, #tpu.memory_space<vmem>>, vector<8x128xf32>
      tpu.vector_store %arg5[%c0, %c0_7], %16 {strides = array<i32>} : memref<8x128xf32, #tpu.memory_space<vmem>>, vector<8x128xf32>,
    } else {
    }
    %c1_i32_1 = arith.constant 1 : i32
    %5 = arith.addi %1, %c1_i32_1 : i32
    %c16_i32 = arith.constant 16 : i32
    %6 = arith.muli %5, %c16_i32 : i32
    %c16_i32_2 = arith.constant 16 : i32
    %7 = arith.cmpi sle, %6, %c16_i32_2 : i32
    %8 = arith.extui %7 : i1 to i32
    %c0_i32_3 = arith.constant 0 : i32
    %9 = arith.cmpi ne, %8, %c0_i32_3 : i32
    scf.if %9 {
      %c0 = arith.constant 0 : index
      %c0_7 = arith.constant 0 : index
      %16 = vector.load %arg2[%c0, %c0_7] : memref<16x128xf32, #tpu.memory_space<vmem>>, vector<16x128xf32>
      %c0_8 = arith.constant 0 : index
      %c0_9 = arith.constant 0 : index
      %17 = vector.load %arg3[%c0_8, %c0_9] : memref<16x128xf32, #tpu.memory_space<vmem>>, vector<16x128xf32>
      %18 = arith.subf %16, %17 : vector<16x128xf32>
      %19 = arith.mulf %18, %18 : vector<16x128xf32>
      %c0_10 = arith.constant 0 : index
      %c0_11 = arith.constant 0 : index
      %20 = vector.load %arg5[%c0_10, %c0_11] : memref<8x128xf32, #tpu.memory_space<vmem>>, vector<8x128xf32>
      %21 = vector.shape_cast %19 : vector<16x128xf32> to vector<2x8x128xf32>
      %cst = arith.constant dense<0.000000e+00> : vector<8x128xf32>
      %22 = vector.multi_reduction <add>, %21, %cst [0] : vector<2x8x128xf32> to vector<8x128xf32>
      %23 = arith.addf %20, %22 : vector<8x128xf32>
      %c0_12 = arith.constant 0 : index
      %c0_13 = arith.constant 0 : index
      %24 = vector.load %arg5[%c0_12, %c0_13] : memref<8x128xf32, #tpu.memory_space<vmem>>, vector<8x128xf32>
      tpu.vector_store %arg5[%c0_12, %c0_13], %23 {strides = array<i32>} : memref<8x128xf32, #tpu.memory_space<vmem>>, vector<8x128xf32>,
    } else {
    }
    %true = arith.constant true
    %10 = arith.xori %7, %true : i1
    %11 = arith.extui %10 : i1 to i32
    %c0_i32_4 = arith.constant 0 : i32
    %12 = arith.cmpi ne, %11, %c0_i32_4 : i32
    scf.if %12 {
      %c0 = arith.constant 0 : index
      %c0_7 = arith.constant 0 : index
      %16 = vector.load %arg2[%c0, %c0_7] : memref<16x128xf32, #tpu.memory_space<vmem>>, vector<16x128xf32>
      %c0_8 = arith.constant 0 : index
      %c0_9 = arith.constant 0 : index
      %17 = vector.load %arg3[%c0_8, %c0_9] : memref<16x128xf32, #tpu.memory_space<vmem>>, vector<16x128xf32>
      %18 = arith.subf %16, %17 : vector<16x128xf32>
      %19 = arith.mulf %18, %18 : vector<16x128xf32>
      %20 = tpu.iota {dimensions = array<i32: 0>} : vector<16x1xi32>
      %c16_i32_10 = arith.constant 16 : i32
      %21 = arith.muli %1, %c16_i32_10 : i32
      %c0_i32_11 = arith.constant 0 : i32
      %22 = arith.addi %21, %c0_i32_11 : i32
      %23 = vector.broadcast %22 : i32 to vector<16x1xi32>
      %24 = arith.addi %23, %20 : vector<16x1xi32>
      %c16_i32_12 = arith.constant 16 : i32
      %25 = vector.broadcast %c16_i32_12 : i32 to vector<16x1xi32>
      %26 = arith.cmpi slt, %24, %25 : vector<16x1xi32>
      %cst = arith.constant 0.000000e+00 : f32
      %27 = vector.shape_cast %26 : vector<16x1xi1> to vector<16x1xi1>
      %28 = vector.broadcast %27 : vector<16x1xi1> to vector<16x128xi1>
      %29 = vector.broadcast %cst : f32 to vector<16x128xf32>
      %30 = arith.select %28, %19, %29 : vector<16x128xi1>, vector<16x128xf32>
      %c0_13 = arith.constant 0 : index
      %c0_14 = arith.constant 0 : index
      %31 = vector.load %arg5[%c0_13, %c0_14] : memref<8x128xf32, #tpu.memory_space<vmem>>, vector<8x128xf32>
      %32 = vector.shape_cast %30 : vector<16x128xf32> to vector<2x8x128xf32>
      %cst_15 = arith.constant dense<0.000000e+00> : vector<8x128xf32>
      %33 = vector.multi_reduction <add>, %32, %cst_15 [0] : vector<2x8x128xf32> to vector<8x128xf32>
      %34 = arith.addf %31, %33 : vector<8x128xf32>
      %c0_16 = arith.constant 0 : index
      %c0_17 = arith.constant 0 : index
      %35 = vector.load %arg5[%c0_16, %c0_17] : memref<8x128xf32, #tpu.memory_space<vmem>>, vector<8x128xf32>
      tpu.vector_store %arg5[%c0_16, %c0_17], %34 {strides = array<i32>} : memref<8x128xf32, #tpu.memory_space<vmem>>, vector<8x128xf32>,
    } else {
    }
    %c0_i32_5 = arith.constant 0 : i32
    %13 = arith.cmpi eq, %arg1, %c0_i32_5 : i32
    %14 = arith.extui %13 : i1 to i32
    %c0_i32_6 = arith.constant 0 : i32
    %15 = arith.cmpi ne, %14, %c0_i32_6 : i32
    scf.if %15 {
      %c0 = arith.constant 0 : index
      %c0_7 = arith.constant 0 : index
      %16 = vector.load %arg5[%c0, %c0_7] : memref<8x128xf32, #tpu.memory_space<vmem>>, vector<8x128xf32>
      %c0_8 = arith.constant 0 : index
      %c0_9 = arith.constant 0 : index
      %c0_10 = arith.constant 0 : index
      %17 = vector.load %arg4[%c0_8, %c0_9, %c0_10] : memref<1x8x128xf32, #tpu.memory_space<vmem>>, vector<1x8x128xf32>
      %18 = vector.shape_cast %17 : vector<1x8x128xf32> to vector<8x128xf32>
      %19 = vector.shape_cast %16 : vector<8x128xf32> to vector<1x8x128xf32>
      tpu.vector_store %arg4[%c0_8, %c0_9, %c0_10], %19 {strides = array<i32>} : memref<1x8x128xf32, #tpu.memory_space<vmem>>, vector<1x8x128xf32>,
    } else {
    }
    return
  }
  func.func @transform_0(%arg0: i32, %arg1: i32) -> (i32, i32) {
    %c1_i32 = arith.constant 1 : i32
    %0 = arith.muli %arg0, %c1_i32 : i32
    %1 = arith.addi %0, %arg1 : i32
    %c0_i32 = arith.constant 0 : i32
    %2 = arith.minsi %1, %c0_i32 : i32
    %c0_i32_0 = arith.constant 0 : i32
    %c0_i32_1 = arith.constant 0 : i32
    return %2, %c0_i32_0 : i32, i32
  }
  func.func @transform_1(%arg0: i32, %arg1: i32) -> (i32, i32) {
    %c1_i32 = arith.constant 1 : i32
    %0 = arith.muli %arg0, %c1_i32 : i32
    %1 = arith.addi %0, %arg1 : i32
    %c0_i32 = arith.constant 0 : i32
    %2 = arith.minsi %1, %c0_i32 : i32
    %c0_i32_0 = arith.constant 0 : i32
    %c0_i32_1 = arith.constant 0 : i32
    return %2, %c0_i32_0 : i32, i32
  }
  func.func @transform_2(%arg0: i32, %arg1: i32) -> (i32, i32, i32) {
    %c0_i32 = arith.constant 0 : i32
    %c0_i32_0 = arith.constant 0 : i32
    %c0_i32_1 = arith.constant 0 : i32
    return %arg0, %c0_i32, %c0_i32_0 : i32, i32, i32
  }
}

</mosaic_0001>

<llo_original>
// kernel: tpu_custom_call.1
$region0: #{tpu_custom_call.1}
  #allocation0 [shape = 'u32[]', space=smem, size = 0x4, offset = 0x4, fixed_abs, tag = 'smem constant byte address 0x4 - core index']
  #allocation1 [shape = 'u32[144,128]{1,0:T(1,128)}', space=vmem, size = 0x12000, scoped, tag = 'internal scratch']
  #allocation2 [shape = 'f32[8,128]{1,0:T(8,128)}', space=vmem, size = 0x1000, scoped, tag = 'scratch operand']
  %s0 = inlined_call_operand.hbm [shape: f32[16,128], index: 0, kind: input, shape index: {}]
  %s1 = inlined_call_operand.hbm [shape: f32[16,128], index: 1, kind: input, shape index: {}]
  %s2 = inlined_call_operand.hbm [shape: f32[2,8,128], index: 2, kind: output, shape index: {}]
  %s3 = sld [smem:[#allocation0]]
  $region65: #{tpu_custom_call.1} parent=0
    _
  %s5 = ssub.s32 1, %s3
  %s6 = scalar_select 0, %s5, %s3
  $region1: #{tpu_custom_call.1} parent=0
    #allocation3 [shape = 'u8[16384]{0}', space=vmem, size = 0x4000, scoped, tag = 'input window, operand 0']
    #allocation4 [shape = 's32[2]{0}', space=sflag, size = 0x8, scoped, tag = 'scoped memory for tpu_custom_call.1']
    #allocation5 [shape = 's32[2]{0}', space=sflag, size = 0x8, scoped, tag = 'scoped memory for tpu_custom_call.1']
    #allocation6 [shape = 'u8[16384]{0}', space=vmem, size = 0x4000, scoped, tag = 'input window, operand 1']
    #allocation7 [shape = 's32[2]{0}', space=sflag, size = 0x8, scoped, tag = 'scoped memory for tpu_custom_call.1']
    #allocation8 [shape = 'u8[8192]{0}', space=vmem, size = 0x2000, scoped, tag = 'output window, operand 0']
    %7 = vsyncpa [#allocation4], 0
    %s8 = scalar_lea.sflag [#allocation4], 1
    %9 = vsyncpa %s8, 0
    %10 = vsyncpa [#allocation7], 0
    %s11 = scalar_lea.sflag [#allocation7], 1
    %12 = vsyncpa %s11, 0
    %13 = vsyncpa [#allocation5], 0
    %s14 = scalar_lea.sflag [#allocation5], 1
    %15 = vsyncpa %s14, 0
    loop: start=0, step=1, limit=4
    $region2: #{tpu_custom_call.1} parent=1 // loop_pre_header
      _
    $region3: #{tpu_custom_call.1} parent=1 // loop_header
      %s17 = sphi 0, %s21
      %p18 = scmp.ge.s32.totalorder %s17, 4
      %s24 = sphi 0, %s36
      %s25 = sphi 0, %s32
      %s26 = sphi 0, %s24
      %s27 = sphi 0, %s25
      %s28 = sphi 0, %s26
      %s29 = sphi 0, %s27
      %s45 = sphi 0, %s47
      %s48 = sphi 0, %s45
      %s49 = sphi 0, %s48
      %s65 = sphi 0, %s49
      %s77 = sphi 0, %s79
      %s80 = sphi 0, %s77
      %s81 = sphi 0, %s80
      %s97 = sphi 0, %s81
      %s103 = sphi 0, %s105
      %s106 = sphi 0, %s103
      %s107 = sphi 0, %s106
      %s123 = sphi 0, %s107
    $region4: #{tpu_custom_call.1} parent=1 // loop_header_branch
      %20 = sbr.rel (%p18) target = $region8
    $region5: #{tpu_custom_call.1} parent=1 // loop_body
      %s22 = ssub.s32 %s17, 1
      %s23 = ssub.s32 %s17, 2
      %s30 = sadd.s32 1, %s25
      %p31 = scmp.ge.s32.totalorder %s30, 1
      %s32 = scalar_select %p31, 0, %s30
      %s33 = sadd.s32 1, %s24
      %s34 = scalar_select %p31, %s33, %s24
      %p35 = scmp.ge.s32.totalorder %s34, 2
      %s36 = scalar_select %p35, 0, %s34
      %s37 = sadd.s32 %s24, %s25
      %p38 = scmp.lt.s32.totalorder %s37, 0
      %s39 = scalar_select %p38, %s37, 0
      %s40 = sadd.s32 %s36, %s32
      %p41 = scmp.lt.s32.totalorder %s40, 0
      %s42 = scalar_select %p41, %s40, 0
      %s43 = ssub.s32 %s39, %s42
      %p44 = scmp.eq.s32.totalorder %s43, 0
      %s46 = sadd.s32 %s45, 1
      %s47 = scalar_select %p44, %s45, %s46
      %p50 = pneg %p44
      %p51 = scmp.eq.s32.totalorder %s17, 1
      %p52 = por %p50, %p51
      %p53 = scmp.ne.s32.totalorder %s45, %s48
      %p54 = scmp.eq.s32.totalorder %s17, 0
      %p55 = por %p53, %p54
      %p56 = scmp.ne.s32.totalorder %s45, %s48
      %p57 = scmp.eq.s32.totalorder %s22, 1
      %p58 = por %p56, %p57
      %p59 = scmp.ne.s32.totalorder %s48, %s49
      %p60 = scmp.eq.s32.totalorder %s22, 0
      %p61 = por %p59, %p60
      %p62 = scmp.ne.s32.totalorder %s48, %s49
      %p63 = scmp.eq.s32.totalorder %s23, 1
      %p64 = por %p62, %p63
      %p66 = scmp.ne.s32.totalorder %s49, %s65
      %p67 = scmp.eq.s32.totalorder %s23, 0
      %p68 = por %p66, %p67
      %s69 = sadd.s32 %s24, %s25
      %p70 = scmp.lt.s32.totalorder %s69, 0
      %s71 = scalar_select %p70, %s69, 0
      %s72 = sadd.s32 %s36, %s32
      %p73 = scmp.lt.s32.totalorder %s72, 0
      %s74 = scalar_select %p73, %s72, 0
      %s75 = ssub.s32 %s71, %s74
      %p76 = scmp.eq.s32.totalorder %s75, 0
      %s78 = sadd.s32 %s77, 1
      %s79 = scalar_select %p76, %s77, %s78
      %p82 = pneg %p76
      %p83 = scmp.eq.s32.totalorder %s17, 1
      %p84 = por %p82, %p83
      %p85 = scmp.ne.s32.totalorder %s77, %s80
      %p86 = scmp.eq.s32.totalorder %s17, 0
      %p87 = por %p85, %p86
      %p88 = scmp.ne.s32.totalorder %s77, %s80
      %p89 = scmp.eq.s32.totalorder %s22, 1
      %p90 = por %p88, %p89
      %p91 = scmp.ne.s32.totalorder %s80, %s81
      %p92 = scmp.eq.s32.totalorder %s22, 0
      %p93 = por %p91, %p92
      %p94 = scmp.ne.s32.totalorder %s80, %s81
      %p95 = scmp.eq.s32.totalorder %s23, 1
      %p96 = por %p94, %p95
      %p98 = scmp.ne.s32.totalorder %s81, %s97
      %p99 = scmp.eq.s32.totalorder %s23, 0
      %p100 = por %p98, %p99
      %s101 = ssub.s32 %s24, %s36
      %p102 = scmp.eq.s32.totalorder %s101, 0
      %s104 = sadd.s32 %s103, 1
      %s105 = scalar_select %p102, %s103, %s104
      %p108 = pneg %p102
      %p109 = scmp.eq.s32.totalorder %s17, 1
      %p110 = por %p108, %p109
      %p111 = scmp.ne.s32.totalorder %s103, %s106
      %p112 = scmp.eq.s32.totalorder %s17, 0
      %p113 = por %p111, %p112
      %p114 = scmp.ne.s32.totalorder %s103, %s106
      %p115 = scmp.eq.s32.totalorder %s22, 1
      %p116 = por %p114, %p115
      %p117 = scmp.ne.s32.totalorder %s106, %s107
      %p118 = scmp.eq.s32.totalorder %s22, 0
      %p119 = por %p117, %p118
      %p120 = scmp.ne.s32.totalorder %s106, %s107
      %p121 = scmp.eq.s32.totalorder %s23, 1
      %p122 = por %p120, %p121
      %p124 = scmp.ne.s32.totalorder %s107, %s123
      %p125 = scmp.eq.s32.totalorder %s23, 0
      %p126 = por %p124, %p125
      %p127 = scmp.le.s32.totalorder 1, %s17
      %p128 = scmp.lt.s32.totalorder %s17, 3
      %p129 = pnand %p127, %p128
      %p130 = pneg %p129
      // Predicated region
      $region9: #{tpu_custom_call.1} parent=5 // pred_check
        _
      $region10: #{tpu_custom_call.1} parent=5 // pred_check_branch
        %132 = sbr.rel (%p129) target = $region12
      $region11: #{tpu_custom_call.1} parent=5 // pred_region
        %s133 = ssub.s32 %s17, 1
      $region12: #{tpu_custom_call.1} parent=5 // pred_fallthru
        _
      %p134 = scmp.lt.s32.totalorder %s17, 2
      // Predicated region
      $region13: #{tpu_custom_call.1} parent=5 // pred_check
        %p135 = pneg %p134
      $region14: #{tpu_custom_call.1} parent=5 // pred_check_branch
        %137 = sbr.rel (%p135) target = $region16
      $region15: #{tpu_custom_call.1} parent=5 // pred_region
        // Predicated region
        $region17: #{tpu_custom_call.1} parent=15 // pred_check
          %p138 = pneg %p55
        $region18: #{tpu_custom_call.1} parent=15 // pred_check_branch
          %140 = sbr.rel (%p138) target = $region20
        $region19: #{tpu_custom_call.1} parent=15 // pred_region
          %s141 = sand.u32 %s45, 1
          %s142 = scalar_lea.sflag [#allocation4], %s141
          %s143 = sand.u32 %s45, 1
          %s144 = smul.addr %s143, 16
          %s145 = scalar_lea.vmem [#allocation3], %s144
          %s146 = sadd.s32 %s24, %s25
          %p147 = scmp.lt.s32.totalorder %s146, 0
          %s148 = scalar_select %p147, %s146, 0
          %s149 = smul.u32 2, %s148
          %s151 = ssub.s32 256, 256
          %152 = vsyncadd %s142, %s151
          %s153 = smul.addr %s149, 128
          %s154 = scalar_lea.hbm %s0, %s153
          %s155 = sshll.u32 %s145, 4
          %s156 = int_to_ptr.vmem [resolvable:$true] %s155
          %161 = dma.hbm_to_vmem [thread:$0]  %s154, 256, %s156, %s142, 128, 128, 8
        $region20: #{tpu_custom_call.1} parent=15 // pred_fallthru
          _
        // Predicated region
        $region21: #{tpu_custom_call.1} parent=15 // pred_check
          %p162 = pneg %p87
        $region22: #{tpu_custom_call.1} parent=15 // pred_check_branch
          %164 = sbr.rel (%p162) target = $region24
        $region23: #{tpu_custom_call.1} parent=15 // pred_region
          %s165 = sand.u32 %s77, 1
          %s166 = scalar_lea.sflag [#allocation7], %s165
          %s167 = sand.u32 %s77, 1
          %s168 = smul.addr %s167, 16
          %s169 = scalar_lea.vmem [#allocation6], %s168
          %s170 = sadd.s32 %s24, %s25
          %p171 = scmp.lt.s32.totalorder %s170, 0
          %s172 = scalar_select %p171, %s170, 0
          %s173 = smul.u32 2, %s172
          %s175 = ssub.s32 256, 256
          %176 = vsyncadd %s166, %s175
          %s177 = smul.addr %s173, 128
          %s178 = scalar_lea.hbm %s1, %s177
          %s179 = sshll.u32 %s169, 4
          %s180 = int_to_ptr.vmem [resolvable:$true] %s179
          %185 = dma.hbm_to_vmem [thread:$0]  %s178, 256, %s180, %s166, 128, 128, 8
        $region24: #{tpu_custom_call.1} parent=15 // pred_fallthru
          _
      $region16: #{tpu_custom_call.1} parent=5 // pred_fallthru
        _
      %p186 = scmp.le.s32.totalorder 1, %s17
      %p187 = scmp.lt.s32.totalorder %s17, 3
      %p188 = pnand %p186, %p187
      %p189 = pneg %p188
      // Predicated region
      $region25: #{tpu_custom_call.1} parent=5 // pred_check
        _
      $region26: #{tpu_custom_call.1} parent=5 // pred_check_branch
        %191 = sbr.rel (%p188) target = $region28
      $region27: #{tpu_custom_call.1} parent=5 // pred_region
        %s192 = ssub.s32 %s17, 1
        %s193 = sand.u32 %s48, 1
        %s194 = scalar_lea.sflag [#allocation4], %s193
        %s195 = sand.u32 %s48, 1
        %s196 = smul.addr %s195, 16
        %s197 = scalar_lea.vmem [#allocation3], %s196
        // Predicated region
        $region29: #{tpu_custom_call.1} parent=27 // pred_check
          %p198 = pneg %p61
        $region30: #{tpu_custom_call.1} parent=27 // pred_check_branch
          %200 = sbr.rel (%p198) target = $region32
        $region31: #{tpu_custom_call.1} parent=27 // pred_region
          %201 = dma.done %s194, 256
        $region32: #{tpu_custom_call.1} parent=27 // pred_fallthru
          _
        %s202 = sand.u32 %s80, 1
        %s203 = scalar_lea.sflag [#allocation7], %s202
        %s204 = sand.u32 %s80, 1
        %s205 = smul.addr %s204, 16
        %s206 = scalar_lea.vmem [#allocation6], %s205
        // Predicated region
        $region33: #{tpu_custom_call.1} parent=27 // pred_check
          %p207 = pneg %p93
        $region34: #{tpu_custom_call.1} parent=27 // pred_check_branch
          %209 = sbr.rel (%p207) target = $region36
        $region35: #{tpu_custom_call.1} parent=27 // pred_region
          %210 = dma.done %s203, 256
        $region36: #{tpu_custom_call.1} parent=27 // pred_fallthru
          _
        %s211 = sand.u32 %s48, 1
        %s212 = scalar_lea.sflag [#allocation4], %s211
        %s213 = sand.u32 %s48, 1
        %s214 = smul.addr %s213, 16
        %s215 = scalar_lea.vmem [#allocation3], %s214
        %p216 = pneg %p61
        %p217 = pneg %p58
        %s218 = sand.u32 %s80, 1
        %s219 = scalar_lea.sflag [#allocation7], %s218
        %s220 = sand.u32 %s80, 1
        %s221 = smul.addr %s220, 16
        %s222 = scalar_lea.vmem [#allocation6], %s221
        %p223 = pneg %p93
        %p224 = pneg %p90
        %p225 = pneg %p119
        %p226 = pneg %p116
        %s227 = sand.u32 %s106, 1
        %s228 = scalar_lea.sflag [#allocation5], %s227
        %s229 = sand.u32 %s106, 1
        %s230 = smul.addr %s229, 8
        %s231 = scalar_lea.vmem [#allocation8], %s230
        %s232 = sadd.s32 %s26, %s27
        %p233 = scmp.lt.s32.totalorder %s232, 0
        %s234 = scalar_select %p233, %s232, 0
        %s235 = smul.u32 2, %s234
        %s236 = sadd.s32 %s26, %s27
        %p237 = scmp.lt.s32.totalorder %s236, 0
        %s238 = scalar_select %p237, %s236, 0
        %s239 = smul.u32 2, %s238
        %s240 = sadd.s32 %s26, %s27
        %p241 = scmp.eq.s32.totalorder %s27, 0
        // Predicated region
        $region37: #{tpu_custom_call.1} parent=27 // pred_check
          %p242 = pneg %p241
        $region38: #{tpu_custom_call.1} parent=27 // pred_check_branch
          %244 = sbr.rel (%p242) target = $region40
        $region39: #{tpu_custom_call.1} parent=27 // pred_region
          %245 = vst [vmem:[#allocation2] sm:$0xff] 0.0
        $region40: #{tpu_custom_call.1} parent=27 // pred_fallthru
          _
        %s246 = sadd.s32 %s240, 1
        %s247 = smul.u32 %s246, 16
        %p248 = scmp.le.s32.totalorder %s247, 16
        // Predicated region
        $region41: #{tpu_custom_call.1} parent=27 // pred_check
          %p249 = pneg %p248
        $region42: #{tpu_custom_call.1} parent=27 // pred_check_branch
          %251 = sbr.rel (%p249) target = $region44
        $region43: #{tpu_custom_call.1} parent=27 // pred_region
          %v252 = vld [vmem:[%s197] sm:$0xff]
          %v253 = vld [vmem:[%s197 + $0x8] sm:$0xff]
          %v254 = vld [vmem:[%s206] sm:$0xff]
          %v255 = vld [vmem:[%s206 + $0x8] sm:$0xff]
          %v256 = vsub.f32 %v252, %v254
          %v257 = vsub.f32 %v253, %v255
          %v258 = vmul.f32 %v256, %v256
          %v259 = vmul.f32 %v257, %v257
          %v260 = vld [vmem:[#allocation2] sm:$0xff]
          %v261 = vadd.f32 %v258, %v259
          %v262 = vadd.f32 %v260, %v261
          %263 = vst [vmem:[#allocation2] sm:$0xff] %v262
        $region44: #{tpu_custom_call.1} parent=27 // pred_fallthru
          _
        %p264 = scmp.gt.s32.totalorder %s247, 16
        // Predicated region
        $region45: #{tpu_custom_call.1} parent=27 // pred_check
          %p265 = pneg %p264
        $region46: #{tpu_custom_call.1} parent=27 // pred_check_branch
          %267 = sbr.rel (%p265) target = $region48
        $region47: #{tpu_custom_call.1} parent=27 // pred_region
          %v268 = vld [vmem:[%s197] sm:$0xff]
          %v269 = vld [vmem:[%s197 + $0x8] sm:$0xff]
          %v270 = vld [vmem:[%s206] sm:$0xff]
          %v271 = vld [vmem:[%s206 + $0x8] sm:$0xff]
          %v272 = vsub.f32 %v268, %v270
          %v273 = vsub.f32 %v269, %v271
          %v274 = vmul.f32 %v272, %v272
          %v275 = vmul.f32 %v273, %v273
          %v276 = vlaneseq
          %v277 = vshrl.u32 %v276, 7
          %v278 = vadd.s32 %v277, 8
          %s279 = smul.u32 %s240, 16
          %v280 = vstv %s279
          %v281 = vadd.s32 %v280, %v277
          %v282 = vadd.s32 %v280, %v278
          %vm283 = vcmp.lt.s32.totalorder %v281, 16
          %vm284 = vcmp.lt.s32.totalorder %v282, 16
          %v285 = vsel %vm283, 1, 0
          %v286 = vsel %vm284, 1, 0
          %vm287 = vcmp.eq.s32.totalorder %v285, 1
          %vm288 = vcmp.eq.s32.totalorder %v286, 1
          %v289 = vsel %vm287, %v274, 0.0
          %v290 = vsel %vm288, %v275, 0.0
          %v291 = vld [vmem:[#allocation2] sm:$0xff]
          %v292 = vadd.f32 %v289, %v290
          %v293 = vadd.f32 %v291, %v292
          %294 = vst [vmem:[#allocation2] sm:$0xff] %v293
        $region48: #{tpu_custom_call.1} parent=27 // pred_fallthru
          _
        // Predicated region
        $region49: #{tpu_custom_call.1} parent=27 // pred_check
          %p295 = pneg %p241
        $region50: #{tpu_custom_call.1} parent=27 // pred_check_branch
          %297 = sbr.rel (%p295) target = $region52
        $region51: #{tpu_custom_call.1} parent=27 // pred_region
          %v298 = vld [vmem:[#allocation2] sm:$0xff]
          %299 = vst [vmem:[%s231] sm:$0xff] %v298
        $region52: #{tpu_custom_call.1} parent=27 // pred_fallthru
          _
        %s300 = sand.u32 %s106, 1
        %s301 = scalar_lea.sflag [#allocation5], %s300
        %s302 = sand.u32 %s106, 1
        %s303 = smul.addr %s302, 8
        %s304 = scalar_lea.vmem [#allocation8], %s303
        // Predicated region
        $region53: #{tpu_custom_call.1} parent=27 // pred_check
          %p305 = pneg %p116
        $region54: #{tpu_custom_call.1} parent=27 // pred_check_branch
          %307 = sbr.rel (%p305) target = $region56
        $region55: #{tpu_custom_call.1} parent=27 // pred_region
          %s309 = ssub.s32 128, 128
          %310 = vsyncadd %s301, %s309
          %s311 = smul.addr %s26, 128
          %s312 = scalar_lea.hbm %s2, %s311
          %s314 = sshll.u32 %s304, 4
          %s315 = int_to_ptr.vmem [resolvable:$true] %s314
          %317 = dma.vmem_to_hbm [thread:$0]  %s315, 128, %s312, %s301
        $region56: #{tpu_custom_call.1} parent=27 // pred_fallthru
          _
      $region28: #{tpu_custom_call.1} parent=5 // pred_fallthru
        _
      %p318 = scmp.le.s32.totalorder 2, %s17
      // Predicated region
      $region57: #{tpu_custom_call.1} parent=5 // pred_check
        %p319 = pneg %p318
      $region58: #{tpu_custom_call.1} parent=5 // pred_check_branch
        %321 = sbr.rel (%p319) target = $region60
      $region59: #{tpu_custom_call.1} parent=5 // pred_region
        %s322 = ssub.s32 %s17, 2
        // Predicated region
        $region61: #{tpu_custom_call.1} parent=59 // pred_check
          %p323 = pneg %p122
        $region62: #{tpu_custom_call.1} parent=59 // pred_check_branch
          %325 = sbr.rel (%p323) target = $region64
        $region63: #{tpu_custom_call.1} parent=59 // pred_region
          %s326 = sand.u32 %s107, 1
          %s327 = scalar_lea.sflag [#allocation5], %s326
          %s328 = sand.u32 %s107, 1
          %s329 = smul.addr %s328, 8
          %s330 = scalar_lea.vmem [#allocation8], %s329
          %331 = dma.done %s327, 128
        $region64: #{tpu_custom_call.1} parent=59 // pred_fallthru
          _
      $region60: #{tpu_custom_call.1} parent=5 // pred_fallthru
        _
    $region6: #{tpu_custom_call.1} parent=1 // loop_footer
      %s21 = sadd.s32 1, %s17
    $region7: #{tpu_custom_call.1} parent=1 // loop_footer_branch
      %16 = sbr.rel target = $region3
    $region8: #{tpu_custom_call.1} parent=1 // loop_exit
      _
    %332 = vsyncpa [#allocation4], 1
    %s333 = scalar_lea.sflag [#allocation4], 1
    %334 = vsyncpa %s333, 1
    %335 = vsyncpa [#allocation7], 1
    %s336 = scalar_lea.sflag [#allocation7], 1
    %337 = vsyncpa %s336, 1
    %338 = vsyncpa [#allocation5], 1
    %s339 = scalar_lea.sflag [#allocation5], 1
    %340 = vsyncpa %s339, 1

</llo_original>
